<compile_context>
chip_gen: v7x
topology: tpu7x:2x2x1
jax: 0.10.0
libtpu: 0.0.40
codegen_flags: <defaults>
</compile_context>

<pallas_src>
import functools

import numpy as np

import jax
import jax.numpy as jnp
from jax.experimental import pallas as pl
from jax.experimental.pallas import tpu as pltpu


def _double_conv_kernel(x_ref, w1_ref, w2_ref, bias_ref, o_ref, *, img_h):
    # x_ref:    (rows, W*Cin)        rows = B_blk*H, f32, channels merged onto the lane axis
    # w1_ref:   (3*W*Cin,  W*Cout)   bf16 banded conv1 weights (BN1 scale folded), ky bands on K
    # w2_ref:   (3*W*Cout, W*Cout)   bf16 banded conv2 weights (BN2 scale folded)
    # bias_ref: (2, W*Cout)          f32: row 0 = BN1 bias tiled over W, row 1 = BN2 bias
    # o_ref:    (rows, W*Cout)       f32, lane-dense output
    rows = x_ref.shape[0]
    biases = bias_ref[...]  # (2, W*Cout) f32

    # Hoisted halo masks, shared by both stages: a single (rows, 1) iota column, broadcast in the
    # jnp.where.  (row % img_h) keeps the sublane roll from bleeding rows between images.
    ridx = jax.lax.broadcasted_iota(jnp.int32, (rows, 1), 0)
    row_in_img = ridx % img_h
    top_mask = row_in_img == 0            # neighbour h-1 is zero padding
    bot_mask = row_in_img == img_h - 1    # neighbour h+1 is zero padding

    def conv_bn_lrelu(x, w_ref, bias_row):
        # x: (rows, K) f32.  Build the h-1 / h+1 neighbour rows with sublane rolls (XLU slot).
        x_dn = jnp.where(top_mask, 0.0, pltpu.roll(x, shift=1, axis=0))          # row r -> x[r-1]
        x_up = jnp.where(bot_mask, 0.0, pltpu.roll(x, shift=rows - 1, axis=0))   # row r -> x[r+1]
        # Single MXU matmul per stage: ky bands concatenated on the contraction axis (K = 3*W*C);
        # operands cast to bf16, accumulation + epilogue stay f32.
        x_cat = jnp.concatenate([x_dn, x, x_up], axis=1).astype(w_ref.dtype)
        y = jnp.dot(x_cat, w_ref[...], preferred_element_type=jnp.float32) + bias_row
        return jnp.where(y >= 0, y, jnp.float32(0.01) * y)  # LeakyReLU, PyTorch default slope

    y1 = conv_bn_lrelu(x_ref[...], w1_ref, biases[0:1, :])   # stage 1 never touches HBM
    y2 = conv_bn_lrelu(y1, w2_ref, biases[1:2, :])           # stage 2
    o_ref[...] = y2.astype(o_ref.dtype)


def _fold_bn(gamma, beta, running_mean, running_var, eps=1e-5):
    scale = gamma.astype(jnp.float32) / jnp.sqrt(running_var.astype(jnp.float32) + eps)
    bias = beta.astype(jnp.float32) - running_mean.astype(jnp.float32) * scale
    return scale, bias  # (Cout,), (Cout,)


def _banded_weight(w_oihw, scale, W):
    """(Cout, Cin, 3, 3) conv weight + per-channel BN scale -> (3, W*Cin, W*Cout) banded weight.

    Band ky satisfies:  out[h, wo*Cout+co] += sum_k  x_row(h+ky-1)[k] * wb[ky][k, wo*Cout+co]
    with wb[ky][(wo+kx-1)*Cin+ci, wo*Cout+co] = scale[co] * w[co, ci, ky, kx]  (columns falling
    outside [0, W) are dropped, which reproduces pad=1 along W).
    """
    Cout, Cin = w_oihw.shape[0], w_oihw.shape[1]
    w = w_oihw.astype(jnp.float32) * scale[:, None, None, None]     # fold BN scale
    w = jnp.transpose(w, (2, 3, 1, 0))                               # (ky, kx, Cin, Cout)

    sel = np.zeros((3, W, W), np.float32)                            # static band selector
    for kx in range(3):
        for wo in range(W):
            wi = wo + kx - 1
            if 0 <= wi < W:
                sel[kx, wi, wo] = 1.0

    wb = jnp.einsum("xio,kxcu->kicou", jnp.asarray(sel), w)          # (3, W, Cin, W, Cout)
    return wb.reshape(3, W * Cin, W * Cout)


def prepare_double_conv(params, W, compute_dtype=jnp.bfloat16):
    """One-time weight preparation (call OUTSIDE the per-step jit if weights are static)."""
    Cout, Cin = params["conv1_w"].shape[0], params["conv1_w"].shape[1]
    s1, b1 = _fold_bn(params["bn1_gamma"], params["bn1_beta"], params["bn1_mean"], params["bn1_var"])
    s2, b2 = _fold_bn(params["bn2_gamma"], params["bn2_beta"], params["bn2_mean"], params["bn2_var"])
    wb1 = _banded_weight(params["conv1_w"], s1, W).reshape(3 * W * Cin, W * Cout).astype(compute_dtype)
    wb2 = _banded_weight(params["conv2_w"], s2, W).reshape(3 * W * Cout, W * Cout).astype(compute_dtype)
    bias = jnp.stack([jnp.tile(b1, W), jnp.tile(b2, W)], axis=0)     # (2, W*Cout), f32
    return {"wb1": wb1, "wb2": wb2, "bias": bias}


def _pick_block_images(n, h, target_rows=256):
    """Largest divisor of n whose row count (B*h) stays around target_rows.

    Fills the MXU M dimension (128/256-deep) and amortizes the ~0.35us per-step overhead.
    On v7x (2 TensorCores) keep >= 2 grid steps so the "parallel" axis splits across cores;
    on v5e/v6e (1 TC) a single big step is best.
    """
    cap = max(1, target_rows // h)
    best = 1
    for d in range(1, n + 1):
        if n % d == 0 and d <= cap:
            best = d
    return best


def double_conv(x_nchw, prep):
    """DoubleConv forward (eval mode). x_nchw: (N, Cin, H, W) -> (N, Cout, H, W), f32."""
    N, Cin, H, W = x_nchw.shape
    WCin = W * Cin
    WCout = prep["wb1"].shape[1]
    Cout = WCout // W

    # NCHW -> (N*H, W*Cin): images stacked on the sublane (row) axis, W*C lane-dense.
    x = jnp.transpose(x_nchw, (0, 2, 3, 1)).reshape(N * H, WCin).astype(jnp.float32)

    b_blk = _pick_block_images(N, H)
    rows_blk = b_blk * H

    out = pl.pallas_call(
        functools.partial(_double_conv_kernel, img_h=H),
        out_shape=jax.ShapeDtypeStruct((N * H, WCout), jnp.float32),
        grid_spec=pltpu.PrefetchScalarGridSpec(
            num_scalar_prefetch=0,
            grid=(N // b_blk,),
            in_specs=[
                pl.BlockSpec((rows_blk, WCin), lambda n: (n, 0)),
                # Grid-invariant index_maps: weights/bias are DMA'd once and reused across steps.
                pl.BlockSpec(prep["wb1"].shape, lambda n: (0, 0)),
                pl.BlockSpec(prep["wb2"].shape, lambda n: (0, 0)),
                pl.BlockSpec((2, WCout), lambda n: (0, 0)),
            ],
            out_specs=pl.BlockSpec((rows_blk, WCout), lambda n: (n, 0)),
        ),
        compiler_params=pltpu.CompilerParams(dimension_semantics=("parallel",)),
    )(x, prep["wb1"], prep["wb2"], prep["bias"])

    out = out.reshape(N, H, W, Cout)
    return jnp.transpose(out, (0, 3, 1, 2))  # -> NCHW


def _reference(x_nchw, params):
    """Pure-JAX f32 reference (lax.conv) for validation."""
    def stage(x, w, gamma, beta, mean, var):
        y = jax.lax.conv_general_dilated(
            x, w, window_strides=(1, 1), padding=((1, 1), (1, 1)),
            dimension_numbers=("NCHW", "OIHW", "NCHW"))
        scale = gamma / jnp.sqrt(var + 1e-5)
        bias = beta - mean * scale
        y = y * scale[None, :, None, None] + bias[None, :, None, None]
        return jnp.where(y >= 0, y, 0.01 * y)

    x = stage(x_nchw, params["conv1_w"], params["bn1_gamma"], params["bn1_beta"],
              params["bn1_mean"], params["bn1_var"])
    x = stage(x, params["conv2_w"], params["bn2_gamma"], params["bn2_beta"],
              params["bn2_mean"], params["bn2_var"])
    return x


if __name__ == "__main__":
    key = jax.random.PRNGKey(0)
    N, Cin, Cout, H, W = 2, 4, 8, 16, 16

    ks = jax.random.split(key, 10)
    x = jax.random.normal(ks[0], (N, Cin, H, W), dtype=jnp.float32)

    params = {
        "conv1_w": 0.1 * jax.random.normal(ks[1], (Cout, Cin, 3, 3), dtype=jnp.float32),
        "bn1_gamma": 1.0 + 0.1 * jax.random.normal(ks[2], (Cout,), dtype=jnp.float32),
        "bn1_beta": 0.1 * jax.random.normal(ks[3], (Cout,), dtype=jnp.float32),
        "bn1_mean": 0.05 * jax.random.normal(ks[4], (Cout,), dtype=jnp.float32),
        "bn1_var": 1.0 + 0.1 * jnp.abs(jax.random.normal(ks[5], (Cout,), dtype=jnp.float32)),
        "conv2_w": 0.1 * jax.random.normal(ks[6], (Cout, Cout, 3, 3), dtype=jnp.float32),
        "bn2_gamma": 1.0 + 0.1 * jax.random.normal(ks[7], (Cout,), dtype=jnp.float32),
        "bn2_beta": 0.1 * jax.random.normal(ks[8], (Cout,), dtype=jnp.float32),
        "bn2_mean": 0.05 * jax.random.normal(ks[9], (Cout,), dtype=jnp.float32),
        "bn2_var": 1.0 + 0.1 * jnp.abs(jax.random.normal(ks[5], (Cout,), dtype=jnp.float32)),
    }

    # Weight prep happens once, outside the jitted per-call path.
    prep = jax.tree_util.tree_map(jax.block_until_ready, prepare_double_conv(params, W))

    fwd = jax.jit(double_conv)
    out = jax.block_until_ready(fwd(x, prep))
    ref = jax.block_until_ready(_reference(x, params))

    assert out.shape == (N, Cout, H, W), out.shape
    err = float(jnp.max(jnp.abs(out - ref)))
    # bf16 MXU operands (f32 accumulation/epilogue): relaxed tolerance vs. the pure-f32 reference.
    assert err < 7.5e-2, err
    print("KERNEL_OK")
</pallas_src>

<mosaic_0001>
module attributes {stable_mosaic.version = 11 : i64} {
  func.func @_double_conv_kernel(%arg0: i32, %arg1: memref<32x64xf32, #tpu.memory_space<vmem>>, %arg2: memref<192x128xbf16, #tpu.memory_space<vmem>>, %arg3: memref<384x128xbf16, #tpu.memory_space<vmem>>, %arg4: memref<2x128xf32, #tpu.memory_space<vmem>>, %arg5: memref<32x128xf32, #tpu.memory_space<vmem>>) attributes {dimension_semantics = [#tpu.dimension_semantics<parallel>], iteration_bounds = array<i64: 1>, scalar_prefetch = 0 : i64, scratch_operands = 0 : i64, tpu.core_type = #tpu.core_type<tc>, window_params = [{transform_indices = @transform_0, window_bounds = array<i64: 32, 64>}, {pipeline_mode = #tpu.pipeline_mode<synchronous>, transform_indices = @transform_1, window_bounds = array<i64: 192, 128>}, {pipeline_mode = #tpu.pipeline_mode<synchronous>, transform_indices = @transform_2, window_bounds = array<i64: 384, 128>}, {pipeline_mode = #tpu.pipeline_mode<synchronous>, transform_indices = @transform_3, window_bounds = array<i64: 2, 128>}, {transform_indices = @transform_4, window_bounds = array<i64: 32, 128>}]} {
    %c0 = arith.constant 0 : index
    %c0_0 = arith.constant 0 : index
    %0 = vector.load %arg4[%c0, %c0_0] : memref<2x128xf32, #tpu.memory_space<vmem>>, vector<2x128xf32>
    %1 = tpu.iota {dimensions = array<i32: 0>} : vector<32x1xi32>
    %c16_i32 = arith.constant 16 : i32
    %c0_i32 = arith.constant 0 : i32
    %2 = arith.cmpi eq, %c16_i32, %c0_i32 : i32
    %c1_i32 = arith.constant 1 : i32
    %3 = arith.select %2, %c1_i32, %c16_i32 : i32
    %4 = vector.broadcast %3 : i32 to vector<32x1xi32>
    %5 = arith.remsi %1, %4 : vector<32x1xi32>
    %c0_i32_1 = arith.constant 0 : i32
    %6 = vector.broadcast %c0_i32_1 : i32 to vector<32x1xi32>
    %7 = arith.cmpi ne, %5, %6 : vector<32x1xi32>
    %c0_i32_2 = arith.constant 0 : i32
    %8 = vector.broadcast %c0_i32_2 : i32 to vector<32x1xi32>
    %9 = arith.cmpi slt, %5, %8 : vector<32x1xi32>
    %c0_i32_3 = arith.constant 0 : i32
    %10 = arith.cmpi slt, %3, %c0_i32_3 : i32
    %11 = vector.broadcast %10 : i1 to vector<32x1xi1>
    %12 = vector.broadcast %11 : vector<32x1xi1> to vector<32x1xi1>
    %13 = arith.xori %9, %12 : vector<32x1xi1>
    %14 = arith.andi %13, %7 : vector<32x1xi1>
    %15 = vector.broadcast %3 : i32 to vector<32x1xi32>
    %16 = arith.addi %5, %15 : vector<32x1xi32>
    %17 = arith.select %14, %16, %5 : vector<32x1xi1>, vector<32x1xi32>
    %c0_i32_4 = arith.constant 0 : i32
    %18 = vector.broadcast %c0_i32_4 : i32 to vector<32x1xi32>
    %19 = arith.cmpi eq, %17, %18 : vector<32x1xi32>
    %c15_i32 = arith.constant 15 : i32
    %20 = vector.broadcast %c15_i32 : i32 to vector<32x1xi32>
    %21 = arith.cmpi eq, %17, %20 : vector<32x1xi32>
    %c0_5 = arith.constant 0 : index
    %c0_6 = arith.constant 0 : index
    %22 = vector.load %arg1[%c0_5, %c0_6] : memref<32x64xf32, #tpu.memory_space<vmem>>, vector<32x64xf32>
    %23 = vector.extract_strided_slice %0 {offsets = [0, 0], sizes = [1, 128], strides = [1, 1]} : vector<2x128xf32> to vector<1x128xf32>
    %c1_i32_7 = arith.constant 1 : i32
    %24 = tpu.dynamic_rotate %22 by %c1_i32_7 dim 0 : vector<32x64xf32>, i32 -> vector<32x64xf32>
    %cst = arith.constant 0.000000e+00 : f32
    %25 = vector.shape_cast %19 : vector<32x1xi1> to vector<32x1xi1>
    %26 = vector.broadcast %25 : vector<32x1xi1> to vector<32x64xi1>
    %27 = vector.broadcast %cst : f32 to vector<32x64xf32>
    %28 = arith.select %26, %27, %24 : vector<32x64xi1>, vector<32x64xf32>
    %c31_i32 = arith.constant 31 : i32
    %29 = tpu.dynamic_rotate %22 by %c31_i32 dim 0 : vector<32x64xf32>, i32 -> vector<32x64xf32>
    %cst_8 = arith.constant 0.000000e+00 : f32
    %30 = vector.shape_cast %21 : vector<32x1xi1> to vector<32x1xi1>
    %31 = vector.broadcast %30 : vector<32x1xi1> to vector<32x64xi1>
    %32 = vector.broadcast %cst_8 : f32 to vector<32x64xf32>
    %33 = arith.select %31, %32, %29 : vector<32x64xi1>, vector<32x64xf32>
    %34 = tpu.concatenate %28, %22, %33 in 1 : vector<32x64xf32>, vector<32x64xf32>, vector<32x64xf32> -> vector<32x192xf32>
    %35 = arith.truncf %34 : vector<32x192xf32> to vector<32x192xbf16>
    %c0_9 = arith.constant 0 : index
    %c0_10 = arith.constant 0 : index
    %36 = vector.load %arg2[%c0_9, %c0_10] : memref<192x128xbf16, #tpu.memory_space<vmem>>, vector<192x128xbf16>
    %cst_11 = arith.constant dense<0.000000e+00> : vector<32x128xf32>
    %37 = tpu.matmul %35, %36, %cst_11 {dimension_numbers = #tpu.dot_dimension_numbers<[1], [0], [0], [1], [0, 0, 1, 1], [], []>} : vector<32x192xbf16>, vector<192x128xbf16>, vector<32x128xf32> -> vector<32x128xf32>
    %38 = vector.broadcast %23 : vector<1x128xf32> to vector<32x128xf32>
    %39 = arith.addf %37, %38 : vector<32x128xf32>
    %cst_12 = arith.constant 0.000000e+00 : f32
    %40 = vector.broadcast %cst_12 : f32 to vector<32x128xf32>
    %41 = arith.cmpf oge, %39, %40 : vector<32x128xf32>
    %cst_13 = arith.constant 0.00999999977 : f32
    %42 = vector.broadcast %cst_13 : f32 to vector<32x128xf32>
    %43 = arith.mulf %42, %39 : vector<32x128xf32>
    %44 = arith.select %41, %39, %43 : vector<32x128xi1>, vector<32x128xf32>
    %45 = vector.extract_strided_slice %0 {offsets = [1, 0], sizes = [1, 128], strides = [1, 1]} : vector<2x128xf32> to vector<1x128xf32>
    %c1_i32_14 = arith.constant 1 : i32
    %46 = tpu.dynamic_rotate %44 by %c1_i32_14 dim 0 : vector<32x128xf32>, i32 -> vector<32x128xf32>
    %cst_15 = arith.constant 0.000000e+00 : f32
    %47 = vector.shape_cast %19 : vector<32x1xi1> to vector<32x1xi1>
    %48 = vector.broadcast %47 : vector<32x1xi1> to vector<32x128xi1>
    %49 = vector.broadcast %cst_15 : f32 to vector<32x128xf32>
    %50 = arith.select %48, %49, %46 : vector<32x128xi1>, vector<32x128xf32>
    %c31_i32_16 = arith.constant 31 : i32
    %51 = tpu.dynamic_rotate %44 by %c31_i32_16 dim 0 : vector<32x128xf32>, i32 -> vector<32x128xf32>
    %cst_17 = arith.constant 0.000000e+00 : f32
    %52 = vector.shape_cast %21 : vector<32x1xi1> to vector<32x1xi1>
    %53 = vector.broadcast %52 : vector<32x1xi1> to vector<32x128xi1>
    %54 = vector.broadcast %cst_17 : f32 to vector<32x128xf32>
    %55 = arith.select %53, %54, %51 : vector<32x128xi1>, vector<32x128xf32>
    %56 = tpu.concatenate %50, %44, %55 in 1 : vector<32x128xf32>, vector<32x128xf32>, vector<32x128xf32> -> vector<32x384xf32>
    %57 = arith.truncf %56 : vector<32x384xf32> to vector<32x384xbf16>
    %c0_18 = arith.constant 0 : index
    %c0_19 = arith.constant 0 : index
    %58 = vector.load %arg3[%c0_18, %c0_19] : memref<384x128xbf16, #tpu.memory_space<vmem>>, vector<384x128xbf16>
    %cst_20 = arith.constant dense<0.000000e+00> : vector<32x128xf32>
    %59 = tpu.matmul %57, %58, %cst_20 {dimension_numbers = #tpu.dot_dimension_numbers<[1], [0], [0], [1], [0, 0, 1, 1], [], []>} : vector<32x384xbf16>, vector<384x128xbf16>, vector<32x128xf32> -> vector<32x128xf32>
    %60 = vector.broadcast %45 : vector<1x128xf32> to vector<32x128xf32>
    %61 = arith.addf %59, %60 : vector<32x128xf32>
    %cst_21 = arith.constant 0.000000e+00 : f32
    %62 = vector.broadcast %cst_21 : f32 to vector<32x128xf32>
    %63 = arith.cmpf oge, %61, %62 : vector<32x128xf32>
    %cst_22 = arith.constant 0.00999999977 : f32
    %64 = vector.broadcast %cst_22 : f32 to vector<32x128xf32>
    %65 = arith.mulf %64, %61 : vector<32x128xf32>
    %66 = arith.select %63, %61, %65 : vector<32x128xi1>, vector<32x128xf32>
    %c0_23 = arith.constant 0 : index
    %c0_24 = arith.constant 0 : index
    %67 = vector.load %arg5[%c0_23, %c0_24] : memref<32x128xf32, #tpu.memory_space<vmem>>, vector<32x128xf32>
    tpu.vector_store %arg5[%c0_23, %c0_24], %66 {strides = array<i32>} : memref<32x128xf32, #tpu.memory_space<vmem>>, vector<32x128xf32>,
    return
  }
  func.func @transform_0(%arg0: i32) -> (i32, i32) {
    %c0_i32 = arith.constant 0 : i32
    %c0_i32_0 = arith.constant 0 : i32
    return %arg0, %c0_i32 : i32, i32
  }
  func.func @transform_1(%arg0: i32) -> (i32, i32) {
    %c0_i32 = arith.constant 0 : i32
    %c0_i32_0 = arith.constant 0 : i32
    %c0_i32_1 = arith.constant 0 : i32
    return %c0_i32, %c0_i32_0 : i32, i32
  }
  func.func @transform_2(%arg0: i32) -> (i32, i32) {
    %c0_i32 = arith.constant 0 : i32
    %c0_i32_0 = arith.constant 0 : i32
    %c0_i32_1 = arith.constant 0 : i32
    return %c0_i32, %c0_i32_0 : i32, i32
  }
  func.func @transform_3(%arg0: i32) -> (i32, i32) {
    %c0_i32 = arith.constant 0 : i32
    %c0_i32_0 = arith.constant 0 : i32
    %c0_i32_1 = arith.constant 0 : i32
    return %c0_i32, %c0_i32_0 : i32, i32
  }
  func.func @transform_4(%arg0: i32) -> (i32, i32) {
    %c0_i32 = arith.constant 0 : i32
    %c0_i32_0 = arith.constant 0 : i32
    return %arg0, %c0_i32 : i32, i32
  }
}

</mosaic_0001>

<llo_original>
// kernel: double_conv.1
$region0: #{double_conv.1}
  #allocation0 [shape = 'u32[]', space=smem, size = 0x4, offset = 0x4, fixed_abs, tag = 'smem constant byte address 0x4 - core index']
  #allocation1 [shape = 'u32[144,128]{1,0:T(1,128)}', space=vmem, size = 0x12000, scoped, tag = 'internal scratch']
  %s0 = inlined_call_operand.vmem [shape: f32[32,64], index: 0, kind: input, shape index: {}]
  %s1 = inlined_call_operand.vmem [shape: bf16[192,128], index: 1, kind: input, shape index: {}]
  %s2 = inlined_call_operand.vmem [shape: bf16[384,128], index: 2, kind: input, shape index: {}]
  %s3 = inlined_call_operand.vmem [shape: f32[2,128], index: 3, kind: input, shape index: {}]
  %s4 = inlined_call_operand.vmem [shape: f32[32,128], index: 4, kind: output, shape index: {}]
  %s5 = sld [smem:[#allocation0]]
  $region26: #{double_conv.1} parent=0
    _
  %s7 = ssub.s32 1, %s5
  %s8 = scalar_select 0, %s7, %s5
  // Predicated region
  $region2: #{double_conv.1} parent=0 // pred_check
    _
  $region3: #{double_conv.1} parent=0 // pred_check_branch
    %10 = sbr.rel (0) target = $region5
  $region4: #{double_conv.1} parent=0 // pred_region
    _
  $region5: #{double_conv.1} parent=0 // pred_fallthru
    _
  // Predicated region
  $region6: #{double_conv.1} parent=0 // pred_check
    _
  $region7: #{double_conv.1} parent=0 // pred_check_branch
    %12 = sbr.rel (0) target = $region9
  $region8: #{double_conv.1} parent=0 // pred_region
    _
  $region9: #{double_conv.1} parent=0 // pred_fallthru
    _
  // Predicated region
  $region10: #{double_conv.1} parent=0 // pred_check
    _
  $region11: #{double_conv.1} parent=0 // pred_check_branch
    %14 = sbr.rel (0) target = $region13
  $region12: #{double_conv.1} parent=0 // pred_region
    _
  $region13: #{double_conv.1} parent=0 // pred_fallthru
    _
  // Predicated region
  $region14: #{double_conv.1} parent=0 // pred_check
    _
  $region15: #{double_conv.1} parent=0 // pred_check_branch
    %16 = sbr.rel (0) target = $region17
  $region16: #{double_conv.1} parent=0 // pred_region
    _
  $region17: #{double_conv.1} parent=0 // pred_fallthru
    _
  %v18 = vld [vmem:[%s3] sm:$0x3]
  %v19 = vlaneseq
  %v20 = vshrl.u32 %v19, 7
  %v21 = vadd.s32 %v20, 8
  %v22 = vadd.s32 %v20, 16
  %v23 = vadd.s32 %v20, 24
  %vm24 = vcmp.lt.s32.totalorder %v20, 0
  %v25 = vsub.s32 0, %v20
  %v26 = vsel %vm24, %v25, %v20
  %v27 = vshrl.u32 %v26, 4
  %v28 = vand.u32 %v26, 15
  %v29 = vsub.s32 0, %v28
  %v30 = vsel %vm24, %v29, %v28
  %vm31 = vcmp.lt.s32.totalorder %v21, 0
  %v32 = vsub.s32 0, %v21
  %v33 = vsel %vm31, %v32, %v21
  %v34 = vshrl.u32 %v33, 4
  %v35 = vand.u32 %v33, 15
  %v36 = vsub.s32 0, %v35
  %v37 = vsel %vm31, %v36, %v35
  %vm38 = vcmp.lt.s32.totalorder %v22, 0
  %v39 = vsub.s32 0, %v22
  %v40 = vsel %vm38, %v39, %v22
  %v41 = vshrl.u32 %v40, 4
  %v42 = vand.u32 %v40, 15
  %v43 = vsub.s32 0, %v42
  %v44 = vsel %vm38, %v43, %v42
  %vm45 = vcmp.lt.s32.totalorder %v23, 0
  %v46 = vsub.s32 0, %v23
  %v47 = vsel %vm45, %v46, %v23
  %v48 = vshrl.u32 %v47, 4
  %v49 = vand.u32 %v47, 15
  %v50 = vsub.s32 0, %v49
  %v51 = vsel %vm45, %v50, %v49
  %vm52 = vcmp.ne.s32.totalorder %v30, 0
  %vm53 = vcmp.ne.s32.totalorder %v37, 0
  %vm54 = vcmp.ne.s32.totalorder %v44, 0
  %vm55 = vcmp.ne.s32.totalorder %v51, 0
  %vm56 = vcmp.lt.s32.totalorder %v30, 0
  %vm57 = vcmp.lt.s32.totalorder %v37, 0
  %vm58 = vcmp.lt.s32.totalorder %v44, 0
  %vm59 = vcmp.lt.s32.totalorder %v51, 0
  %vm60 = vmand %vm56, %vm52
  %vm61 = vmand %vm57, %vm53
  %vm62 = vmand %vm58, %vm54
  %vm63 = vmand %vm59, %vm55
  %v64 = vadd.s32 %v30, 16
  %v65 = vadd.s32 %v37, 16
  %v66 = vadd.s32 %v44, 16
  %v67 = vadd.s32 %v51, 16
  %v68 = vsel %vm60, %v64, %v30
  %v69 = vsel %vm61, %v65, %v37
  %v70 = vsel %vm62, %v66, %v44
  %v71 = vsel %vm63, %v67, %v51
  %vm72 = vcmp.eq.s32.totalorder %v68, 0
  %vm73 = vcmp.eq.s32.totalorder %v69, 0
  %vm74 = vcmp.eq.s32.totalorder %v70, 0
  %vm75 = vcmp.eq.s32.totalorder %v71, 0
  %vm76 = vcmp.eq.s32.totalorder %v68, 15
  %vm77 = vcmp.eq.s32.totalorder %v69, 15
  %vm78 = vcmp.eq.s32.totalorder %v70, 15
  %vm79 = vcmp.eq.s32.totalorder %v71, 15
  %v80 = vld [vmem:[%s0] sm:$0xff]
  %v81 = vld [vmem:[%s0 + $0x8] sm:$0xff]
  %v82 = vld [vmem:[%s0 + $0x10] sm:$0xff]
  %v83 = vld [vmem:[%s0 + $0x18] sm:$0xff]
  %v84 = vrot.slane %v80, 7
  %v85 = vrot.slane %v81, 7
  %v86 = vrot.slane %v82, 7
  %v87 = vrot.slane %v83, 7
  %vm88 = vcmp.lt.s32.totalorder %v20, 1
  %v89 = vsel %vm88, %v86, %v87
  %v90 = vsel %vm88, %v85, %v86
  %v91 = vsel %vm88, %v84, %v85
  %v92 = vsel %vm88, %v87, %v84
  %v93 = vsel %vm72, 1, 0
  %v94 = vsel %vm73, 1, 0
  %v95 = vsel %vm74, 1, 0
  %v96 = vsel %vm75, 1, 0
  %vm97 = vcmp.eq.s32.totalorder %v93, 1
  %vm98 = vcmp.eq.s32.totalorder %v94, 1
  %vm99 = vcmp.eq.s32.totalorder %v95, 1
  %vm100 = vcmp.eq.s32.totalorder %v96, 1
  %v101 = vsel %vm97, 0.0, %v92
  %v102 = vsel %vm98, 0.0, %v91
  %v103 = vsel %vm99, 0.0, %v90
  %v104 = vsel %vm100, 0.0, %v89
  %v105 = vrot.slane %v80, 1
  %v106 = vrot.slane %v81, 1
  %v107 = vrot.slane %v82, 1
  %v108 = vrot.slane %v83, 1
  %vm109 = vcmp.lt.s32.totalorder %v20, 7
  %v110 = vsel %vm109, %v107, %v108
  %v111 = vsel %vm109, %v106, %v107
  %v112 = vsel %vm109, %v105, %v106
  %v113 = vsel %vm109, %v108, %v105
  %v114 = vsel %vm76, 1, 0
  %v115 = vsel %vm77, 1, 0
  %v116 = vsel %vm78, 1, 0
  %v117 = vsel %vm79, 1, 0
  %vm118 = vcmp.eq.s32.totalorder %v114, 1
  %vm119 = vcmp.eq.s32.totalorder %v115, 1
  %vm120 = vcmp.eq.s32.totalorder %v116, 1
  %vm121 = vcmp.eq.s32.totalorder %v117, 1
  %v122 = vsel %vm118, 0.0, %v112
  %v123 = vsel %vm119, 0.0, %v111
  %v124 = vsel %vm120, 0.0, %v110
  %v125 = vsel %vm121, 0.0, %v113
  %130 = vrot.lane.b32.xlu0 %v80, 64
  %v131 = vpop.permute.xlu0 %130
  %132 = vrot.lane.b32.xlu0 %v81, 64
  %v133 = vpop.permute.xlu0 %132
  %134 = vrot.lane.b32.xlu0 %v82, 64
  %v135 = vpop.permute.xlu0 %134
  %136 = vrot.lane.b32.xlu0 %v83, 64
  %v137 = vpop.permute.xlu0 %136
  %vm142 = vcmask 523264
  %v143 = vsel %vm142, %v101, %v131
  %v144 = vsel %vm142, %v102, %v133
  %v145 = vsel %vm142, %v103, %v135
  %v146 = vsel %vm142, %v104, %v137
  %v147 = vpack.c.bf16 %v144, %v143
  %v148 = vpack.c.bf16 %v123, %v122
  %v149 = vpack.c.bf16 %v146, %v145
  %v150 = vpack.c.bf16 %v125, %v124
  %v151 = vld [vmem:[%s1] sm:$0xf]
  %v152 = vld [vmem:[%s1 + $0x4] sm:$0xf]
  %v153 = vld [vmem:[%s1 + $0x8] sm:$0xf]
  %v154 = vld [vmem:[%s1 + $0xc] sm:$0xf]
  %v155 = vld [vmem:[%s1 + $0x10] sm:$0xf]
  %v156 = vld [vmem:[%s1 + $0x14] sm:$0xf]
  %v157 = vld [vmem:[%s1 + $0x18] sm:$0xf]
  %v158 = vld [vmem:[%s1 + $0x1c] sm:$0xf]
  %v159 = vld [vmem:[%s1 + $0x20] sm:$0xf]
  %v160 = vld [vmem:[%s1 + $0x24] sm:$0xf]
  %v161 = vld [vmem:[%s1 + $0x28] sm:$0xf]
  %v162 = vld [vmem:[%s1 + $0x2c] sm:$0xf]
  %v163 = vld [vmem:[%s1 + $0x30] sm:$0xf]
  %v164 = vld [vmem:[%s1 + $0x34] sm:$0xf]
  %v165 = vld [vmem:[%s1 + $0x38] sm:$0xf]
  %v166 = vld [vmem:[%s1 + $0x3c] sm:$0xf]
  %v167 = vld [vmem:[%s1 + $0x40] sm:$0xf]
  %v168 = vld [vmem:[%s1 + $0x44] sm:$0xf]
  %v169 = vld [vmem:[%s1 + $0x48] sm:$0xf]
  %v170 = vld [vmem:[%s1 + $0x4c] sm:$0xf]
  %v171 = vld [vmem:[%s1 + $0x50] sm:$0xf]
  %v172 = vld [vmem:[%s1 + $0x54] sm:$0xf]
  %v173 = vld [vmem:[%s1 + $0x58] sm:$0xf]
  %v174 = vld [vmem:[%s1 + $0x5c] sm:$0xf]
  %v175 = vlaneseq
  %v176 = vshrl.u32 %v175, 7
  %v177 = vsub.s32 0, %v176
  %v178 = vrot.slane %v18, %v177
  %v203 = vunpack.c.l.b16 %v151
  %v204 = vunpack.c.l.b16 %v152
  %v205 = vunpack.c.l.b16 %v153
  %v206 = vunpack.c.l.b16 %v154
  %v207 = vunpack.c.l.b16 %v155
  %v208 = vunpack.c.l.b16 %v156
  %v209 = vunpack.c.l.b16 %v157
  %v210 = vunpack.c.l.b16 %v158
  %v211 = vunpack.c.l.b16 %v159
  %v212 = vunpack.c.l.b16 %v160
  %v213 = vunpack.c.l.b16 %v161
  %v214 = vunpack.c.l.b16 %v162
  %v215 = vunpack.c.l.b16 %v163
  %v216 = vunpack.c.l.b16 %v164
  %v217 = vunpack.c.l.b16 %v165
  %v218 = vunpack.c.l.b16 %v166
  %v219 = vunpack.c.l.b16 %v167
  %v220 = vunpack.c.l.b16 %v168
  %v221 = vunpack.c.l.b16 %v169
  %v222 = vunpack.c.l.b16 %v170
  %v223 = vunpack.c.l.b16 %v171
  %v224 = vunpack.c.l.b16 %v172
  %v225 = vunpack.c.l.b16 %v173
  %v226 = vunpack.c.l.b16 %v174
  %v227 = vpack.c.b16 %v204, %v203
  %v228 = vpack.c.b16 %v206, %v205
  %v229 = vpack.c.b16 %v208, %v207
  %v230 = vpack.c.b16 %v210, %v209
  %v231 = vpack.c.b16 %v212, %v211
  %v232 = vpack.c.b16 %v214, %v213
  %v233 = vpack.c.b16 %v216, %v215
  %v234 = vpack.c.b16 %v218, %v217
  %v235 = vpack.c.b16 %v220, %v219
  %v236 = vpack.c.b16 %v222, %v221
  %v237 = vpack.c.b16 %v224, %v223
  %v238 = vpack.c.b16 %v226, %v225
  %v252 = vsel %vm142, %v148, 0
  %v255 = vsel %vm142, %v150, 0
  %257 = vmatprep.subr.bf16.mxu0 0
  %258 = vmatpush1.bf16.msra.mxu0 %v227
  %259 = vmatprep.subr.bf16.mxu0 0
  %260 = vmatpush1.bf16.msra.mxu0 %v228
  %261 = vmatprep.subr.bf16.mxu0 0
  %262 = vmatpush1.bf16.msra.mxu0 %v229
  %263 = vmatprep.subr.bf16.mxu0 0
  %264 = vmatpush1.bf16.msra.mxu0 %v230
  %265 = vmatprep.subr.bf16.mxu0 0
  %266 = vmatpush1.bf16.msra.mxu0 %v231
  %267 = vmatprep.subr.bf16.mxu0 0
  %268 = vmatpush1.bf16.msra.mxu0 %v232
  %269 = vmatprep.subr.bf16.mxu0 0
  %270 = vmatpush1.bf16.msra.mxu0 %v233
  %271 = vmatprep.subr.bf16.mxu0 0
  %272 = vmatpush1.bf16.msra.mxu0 %v234
  %273 = vmatprep.subr.bf16.mxu0 0
  %274 = vmatpush1.bf16.msra.mxu0 %v235
  %275 = vmatprep.subr.bf16.mxu0 0
  %276 = vmatpush1.bf16.msra.mxu0 %v236
  %277 = vmatprep.subr.bf16.mxu0 0
  %278 = vmatpush1.bf16.msra.mxu0 %v237
  %279 = vmatprep.subr.bf16.mxu0 0
  %280 = vmatpush1.bf16.msra.mxu0 %v238
  %281 = vmatprep.subr.bf16.mxu0 0
  %282 = vmatpush1.bf16.msra.mxu0 0
  %283 = vmatprep.subr.bf16.mxu0 0
  %284 = vmatpush1.bf16.msra.mxu0 0
  %285 = vmatprep.subr.bf16.mxu0 0
  %286 = vmatpush1.bf16.msra.mxu0 0
  %287 = vmatprep.subr.bf16.mxu0 0
  %288 = vmatpush1.bf16.msra.mxu0 0
  %289 = vmatprep.mubr.bf16.mxu0 %v252
  %290 = vmatmul.mubr.bf16.gmra.mrb[0].mxu0 %v147
  %v291 = vpop.f32.mrb[0].mxu0
  %v292 = vadd.f32 %v178, %v291
  %v293 = vpop.f32.mrb[0].mxu0
  %v294 = vpop.f32.mrb[0].mxu0
  %v295 = vadd.f32 %v178, %v294
  %v296 = vpop.f32.mrb[0].mxu0
  %297 = vmatprep.mubr.bf16.mxu0 %v255
  %298 = vmatmul.mubr.bf16.gmra.mrb[0].mxu0 %v149
  %v299 = vpop.f32.mrb[0].mxu0
  %v300 = vadd.f32 %v178, %v299
  %v301 = vpop.f32.mrb[0].mxu0
  %v302 = vpop.f32.mrb[0].mxu0
  %v303 = vadd.f32 %v178, %v302
  %v304 = vpop.f32.mrb[0].mxu0
  %305 = vdwg.mxu0
  %vm306 = vcmp.ge.f32.partialorder %v292, 0.0
  %vm307 = vcmp.ge.f32.partialorder %v295, 0.0
  %vm308 = vcmp.ge.f32.partialorder %v300, 0.0
  %vm309 = vcmp.ge.f32.partialorder %v303, 0.0
  %v310 = vmul.f32 %v292, 0.01
  %v311 = vmul.f32 %v295, 0.01
  %v312 = vmul.f32 %v300, 0.01
  %v313 = vmul.f32 %v303, 0.01
  %v314 = vsel %vm306, %v292, %v310
  %v315 = vsel %vm307, %v295, %v311
  %v316 = vsel %vm308, %v300, %v312
  %v317 = vsel %vm309, %v303, %v313
  %v318 = vrot.slane %v314, 7
  %v319 = vrot.slane %v315, 7
  %v320 = vrot.slane %v316, 7
  %v321 = vrot.slane %v317, 7
  %v322 = vsel %vm88, %v320, %v321
  %v323 = vsel %vm88, %v319, %v320
  %v324 = vsel %vm88, %v318, %v319
  %v325 = vsel %vm88, %v321, %v318
  %v326 = vsel %vm97, 0.0, %v325
  %v327 = vsel %vm98, 0.0, %v324
  %v328 = vsel %vm99, 0.0, %v323
  %v329 = vsel %vm100, 0.0, %v322
  %v330 = vrot.slane %v314, 1
  %v331 = vrot.slane %v315, 1
  %v332 = vrot.slane %v316, 1
  %v333 = vrot.slane %v317, 1
  %v334 = vsel %vm109, %v332, %v333
  %v335 = vsel %vm109, %v331, %v332
  %v336 = vsel %vm109, %v330, %v331
  %v337 = vsel %vm109, %v333, %v330
  %v338 = vsel %vm118, 0.0, %v336
  %v339 = vsel %vm119, 0.0, %v335
  %v340 = vsel %vm120, 0.0, %v334
  %v341 = vsel %vm121, 0.0, %v337
  %v342 = vpack.c.bf16 %v327, %v326
  %v343 = vpack.c.bf16 %v315, %v314
  %v344 = vpack.c.bf16 %v339, %v338
  %v345 = vpack.c.bf16 %v329, %v328
  %v346 = vpack.c.bf16 %v317, %v316
  %v347 = vpack.c.bf16 %v341, %v340
  %v348 = vld [vmem:[%s2] sm:$0xf]
  %v349 = vld [vmem:[%s2 + $0x4] sm:$0xf]
  %v350 = vld [vmem:[%s2 + $0x8] sm:$0xf]
  %v351 = vld [vmem:[%s2 + $0xc] sm:$0xf]
  %v352 = vld [vmem:[%s2 + $0x10] sm:$0xf]
  %v353 = vld [vmem:[%s2 + $0x14] sm:$0xf]
  %v354 = vld [vmem:[%s2 + $0x18] sm:$0xf]
  %v355 = vld [vmem:[%s2 + $0x1c] sm:$0xf]
  %v356 = vld [vmem:[%s2 + $0x20] sm:$0xf]
  %v357 = vld [vmem:[%s2 + $0x24] sm:$0xf]
  %v358 = vld [vmem:[%s2 + $0x28] sm:$0xf]
  %v359 = vld [vmem:[%s2 + $0x2c] sm:$0xf]
  %v360 = vld [vmem:[%s2 + $0x30] sm:$0xf]
  %v361 = vld [vmem:[%s2 + $0x34] sm:$0xf]
  %v362 = vld [vmem:[%s2 + $0x38] sm:$0xf]
  %v363 = vld [vmem:[%s2 + $0x3c] sm:$0xf]
  %v364 = vld [vmem:[%s2 + $0x40] sm:$0xf]
  %v365 = vld [vmem:[%s2 + $0x44] sm:$0xf]
  %v366 = vld [vmem:[%s2 + $0x48] sm:$0xf]
  %v367 = vld [vmem:[%s2 + $0x4c] sm:$0xf]
  %v368 = vld [vmem:[%s2 + $0x50] sm:$0xf]
  %v369 = vld [vmem:[%s2 + $0x54] sm:$0xf]
  %v370 = vld [vmem:[%s2 + $0x58] sm:$0xf]
  %v371 = vld [vmem:[%s2 + $0x5c] sm:$0xf]
  %v372 = vld [vmem:[%s2 + $0x60] sm:$0xf]
  %v373 = vld [vmem:[%s2 + $0x64] sm:$0xf]
  %v374 = vld [vmem:[%s2 + $0x68] sm:$0xf]
  %v375 = vld [vmem:[%s2 + $0x6c] sm:$0xf]
  %v376 = vld [vmem:[%s2 + $0x70] sm:$0xf]
  %v377 = vld [vmem:[%s2 + $0x74] sm:$0xf]
  %v378 = vld [vmem:[%s2 + $0x78] sm:$0xf]
  %v379 = vld [vmem:[%s2 + $0x7c] sm:$0xf]
  %v380 = vld [vmem:[%s2 + $0x80] sm:$0xf]
  %v381 = vld [vmem:[%s2 + $0x84] sm:$0xf]
  %v382 = vld [vmem:[%s2 + $0x88] sm:$0xf]
  %v383 = vld [vmem:[%s2 + $0x8c] sm:$0xf]
  %v384 = vld [vmem:[%s2 + $0x90] sm:$0xf]
  %v385 = vld [vmem:[%s2 + $0x94] sm:$0xf]
  %v386 = vld [vmem:[%s2 + $0x98] sm:$0xf]
  %v387 = vld [vmem:[%s2 + $0x9c] sm:$0xf]
  %v388 = vld [vmem:[%s2 + $0xa0] sm:$0xf]
  %v389 = vld [vmem:[%s2 + $0xa4] sm:$0xf]
  %v390 = vld [vmem:[%s2 + $0xa8] sm:$0xf]
  %v391 = vld [vmem:[%s2 + $0xac] sm:$0xf]
  %v392 = vld [vmem:[%s2 + $0xb0] sm:$0xf]
  %v393 = vld [vmem:[%s2 + $0xb4] sm:$0xf]
  %v394 = vld [vmem:[%s2 + $0xb8] sm:$0xf]
  %v395 = vld [vmem:[%s2 + $0xbc] sm:$0xf]
  %v396 = vlaneseq
  %v397 = vshrl.u32 %v396, 7
  %v398 = vsub.s32 1, %v397
  %v399 = vrot.slane %v18, %v398
  %v448 = vunpack.c.l.b16 %v348
  %v449 = vunpack.c.l.b16 %v349
  %v450 = vunpack.c.l.b16 %v350
  %v451 = vunpack.c.l.b16 %v351
  %v452 = vunpack.c.l.b16 %v352
  %v453 = vunpack.c.l.b16 %v353
  %v454 = vunpack.c.l.b16 %v354
  %v455 = vunpack.c.l.b16 %v355
  %v456 = vunpack.c.l.b16 %v356
  %v457 = vunpack.c.l.b16 %v357
  %v458 = vunpack.c.l.b16 %v358
  %v459 = vunpack.c.l.b16 %v359
  %v460 = vunpack.c.l.b16 %v360
  %v461 = vunpack.c.l.b16 %v361
  %v462 = vunpack.c.l.b16 %v362
  %v463 = vunpack.c.l.b16 %v363
  %v464 = vunpack.c.l.b16 %v364
  %v465 = vunpack.c.l.b16 %v365
  %v466 = vunpack.c.l.b16 %v366
  %v467 = vunpack.c.l.b16 %v367
  %v468 = vunpack.c.l.b16 %v368
  %v469 = vunpack.c.l.b16 %v369
  %v470 = vunpack.c.l.b16 %v370
  %v471 = vunpack.c.l.b16 %v371
  %v472 = vunpack.c.l.b16 %v372
  %v473 = vunpack.c.l.b16 %v373
  %v474 = vunpack.c.l.b16 %v374
  %v475 = vunpack.c.l.b16 %v375
  %v476 = vunpack.c.l.b16 %v376
  %v477 = vunpack.c.l.b16 %v377
  %v478 = vunpack.c.l.b16 %v378
  %v479 = vunpack.c.l.b16 %v379
  %v480 = vunpack.c.l.b16 %v380
  %v481 = vunpack.c.l.b16 %v381
  %v482 = vunpack.c.l.b16 %v382
  %v483 = vunpack.c.l.b16 %v383
  %v484 = vunpack.c.l.b16 %v384
  %v485 = vunpack.c.l.b16 %v385
  %v486 = vunpack.c.l.b16 %v386
  %v487 = vunpack.c.l.b16 %v387
  %v488 = vunpack.c.l.b16 %v388
  %v489 = vunpack.c.l.b16 %v389
  %v490 = vunpack.c.l.b16 %v390
  %v491 = vunpack.c.l.b16 %v391
  %v492 = vunpack.c.l.b16 %v392
  %v493 = vunpack.c.l.b16 %v393
  %v494 = vunpack.c.l.b16 %v394
  %v495 = vunpack.c.l.b16 %v395
  %v496 = vpack.c.b16 %v449, %v448
  %v497 = vpack.c.b16 %v451, %v450
  %v498 = vpack.c.b16 %v453, %v452
  %v499 = vpack.c.b16 %v455, %v454
  %v500 = vpack.c.b16 %v457, %v456
  %v501 = vpack.c.b16 %v459, %v458
  %v502 = vpack.c.b16 %v461, %v460
  %v503 = vpack.c.b16 %v463, %v462
  %v504 = vpack.c.b16 %v465, %v464
  %v505 = vpack.c.b16 %v467, %v466
  %v506 = vpack.c.b16 %v469, %v468
  %v507 = vpack.c.b16 %v471, %v470
  %v508 = vpack.c.b16 %v473, %v472
  %v509 = vpack.c.b16 %v475, %v474
  %v510 = vpack.c.b16 %v477, %v476
  %v511 = vpack.c.b16 %v479, %v478
  %v512 = vpack.c.b16 %v481, %v480
  %v513 = vpack.c.b16 %v483, %v482
  %v514 = vpack.c.b16 %v485, %v484
  %v515 = vpack.c.b16 %v487, %v486
  %v516 = vpack.c.b16 %v489, %v488
  %v517 = vpack.c.b16 %v491, %v490
  %v518 = vpack.c.b16 %v493, %v492
  %v519 = vpack.c.b16 %v495, %v494
  %544 = vmatprep.subr.bf16.mxu0 0
  %545 = vmatpush1.bf16.msra.mxu0 %v496
  %546 = vmatprep.subr.bf16.mxu0 0
  %547 = vmatpush1.bf16.msra.mxu0 %v497
  %548 = vmatprep.subr.bf16.mxu0 0
  %549 = vmatpush1.bf16.msra.mxu0 %v498
  %550 = vmatprep.subr.bf16.mxu0 0
  %551 = vmatpush1.bf16.msra.mxu0 %v499
  %552 = vmatprep.subr.bf16.mxu0 0
  %553 = vmatpush1.bf16.msra.mxu0 %v500
  %554 = vmatprep.subr.bf16.mxu0 0
  %555 = vmatpush1.bf16.msra.mxu0 %v501
  %556 = vmatprep.subr.bf16.mxu0 0
  %557 = vmatpush1.bf16.msra.mxu0 %v502
  %558 = vmatprep.subr.bf16.mxu0 0
  %559 = vmatpush1.bf16.msra.mxu0 %v503
  %560 = vmatprep.subr.bf16.mxu0 0
  %561 = vmatpush1.bf16.msra.mxu0 %v504
  %562 = vmatprep.subr.bf16.mxu0 0
  %563 = vmatpush1.bf16.msra.mxu0 %v505
  %564 = vmatprep.subr.bf16.mxu0 0
  %565 = vmatpush1.bf16.msra.mxu0 %v506
  %566 = vmatprep.subr.bf16.mxu0 0
  %567 = vmatpush1.bf16.msra.mxu0 %v507
  %568 = vmatprep.subr.bf16.mxu0 0
  %569 = vmatpush1.bf16.msra.mxu0 %v508
  %570 = vmatprep.subr.bf16.mxu0 0
  %571 = vmatpush1.bf16.msra.mxu0 %v509
  %572 = vmatprep.subr.bf16.mxu0 0
  %573 = vmatpush1.bf16.msra.mxu0 %v510
  %574 = vmatprep.subr.bf16.mxu0 0
  %575 = vmatpush1.bf16.msra.mxu0 %v511
  %576 = vmatprep.mubr.bf16.mxu0 %v343
  %577 = vmatmul.mubr.bf16.gmra.mrb[0].mxu0 %v342
  %v578 = vpop.f32.mrb[0].mxu0
  %v579 = vadd.f32 %v399, %v578
  %v580 = vpop.f32.mrb[0].mxu0
  %v581 = vpop.f32.mrb[0].mxu0
  %v582 = vadd.f32 %v399, %v581
  %v583 = vpop.f32.mrb[0].mxu0
  %584 = vmatprep.mubr.bf16.mxu0 %v346
  %585 = vmatmul.mubr.bf16.gmra.mrb[0].mxu0 %v345
  %v586 = vpop.f32.mrb[0].mxu0
  %v587 = vadd.f32 %v399, %v586
  %v588 = vpop.f32.mrb[0].mxu0
  %v589 = vpop.f32.mrb[0].mxu0
  %v590 = vadd.f32 %v399, %v589
  %v591 = vpop.f32.mrb[0].mxu0
  %592 = vdwg.mxu0
  %593 = vmatprep.subr.bf16.mxu0 0
  %594 = vmatpush1.bf16.msra.mxu0 %v512
  %595 = vmatprep.subr.bf16.mxu0 0
  %596 = vmatpush1.bf16.msra.mxu0 %v513
  %597 = vmatprep.subr.bf16.mxu0 0
  %598 = vmatpush1.bf16.msra.mxu0 %v514
  %599 = vmatprep.subr.bf16.mxu0 0
  %600 = vmatpush1.bf16.msra.mxu0 %v515
  %601 = vmatprep.subr.bf16.mxu0 0
  %602 = vmatpush1.bf16.msra.mxu0 %v516
  %603 = vmatprep.subr.bf16.mxu0 0
  %604 = vmatpush1.bf16.msra.mxu0 %v517
  %605 = vmatprep.subr.bf16.mxu0 0
  %606 = vmatpush1.bf16.msra.mxu0 %v518
  %607 = vmatprep.subr.bf16.mxu0 0
  %608 = vmatpush1.bf16.msra.mxu0 %v519
  %609 = vmatprep.subr.bf16.mxu0 0
  %610 = vmatpush1.bf16.msra.mxu0 0
  %611 = vmatprep.subr.bf16.mxu0 0
  %612 = vmatpush1.bf16.msra.mxu0 0
  %613 = vmatprep.subr.bf16.mxu0 0
  %614 = vmatpush1.bf16.msra.mxu0 0
  %615 = vmatprep.subr.bf16.mxu0 0
  %616 = vmatpush1.bf16.msra.mxu0 0
  %617 = vmatprep.subr.bf16.mxu0 0
  %618 = vmatpush1.bf16.msra.mxu0 0
  %619 = vmatprep.subr.bf16.mxu0 0
  %620 = vmatpush1.bf16.msra.mxu0 0
  %621 = vmatprep.subr.bf16.mxu0 0
  %622 = vmatpush1.bf16.msra.mxu0 0
  %623 = vmatprep.subr.bf16.mxu0 0
  %624 = vmatpush1.bf16.msra.mxu0 0
  %625 = vmatprep.mubr.bf16.mxu0 0
  %626 = vmatmul.mubr.bf16.gmra.mrb[0].mxu0 %v344
  %v627 = vpop.f32.mrb[0].mxu0
  %v628 = vadd.f32 %v579, %v627
  %v629 = vpop.f32.mrb[0].mxu0
  %v630 = vpop.f32.mrb[0].mxu0
  %v631 = vadd.f32 %v582, %v630
  %v632 = vpop.f32.mrb[0].mxu0
  %633 = vmatprep.mubr.bf16.mxu0 0
  %634 = vmatmul.mubr.bf16.gmra.mrb[0].mxu0 %v347
  %v635 = vpop.f32.mrb[0].mxu0
  %v636 = vadd.f32 %v587, %v635
  %v637 = vpop.f32.mrb[0].mxu0
  %v638 = vpop.f32.mrb[0].mxu0
  %v639 = vadd.f32 %v590, %v638
  %v640 = vpop.f32.mrb[0].mxu0
  %641 = vdwg.mxu0
  %vm642 = vcmp.ge.f32.partialorder %v628, 0.0
  %vm643 = vcmp.ge.f32.partialorder %v631, 0.0
  %vm644 = vcmp.ge.f32.partialorder %v636, 0.0
  %vm645 = vcmp.ge.f32.partialorder %v639, 0.0
  %v646 = vmul.f32 %v628, 0.01
  %v647 = vmul.f32 %v631, 0.01
  %v648 = vmul.f32 %v636, 0.01
  %v649 = vmul.f32 %v639, 0.01
  %v650 = vsel %vm642, %v628, %v646
  %v651 = vsel %vm643, %v631, %v647
  %v652 = vsel %vm644, %v636, %v648
  %v653 = vsel %vm645, %v639, %v649
  %654 = vst [vmem:[%s4] sm:$0xff] %v650
  %655 = vst [vmem:[%s4 + $0x8] sm:$0xff] %v651
  %656 = vst [vmem:[%s4 + $0x10] sm:$0xff] %v652
  %657 = vst [vmem:[%s4 + $0x18] sm:$0xff] %v653
  // Predicated region
  $region18: #{double_conv.1} parent=0 // pred_check
    _
  $region19: #{double_conv.1} parent=0 // pred_check_branch
    %659 = sbr.rel (0) target = $region21
  $region20: #{double_conv.1} parent=0 // pred_region
    _
  $region21: #{double_conv.1} parent=0 // pred_fallthru
    _
  // Predicated region
  $region22: #{double_conv.1} parent=0 // pred_check
    _
  $region23: #{double_conv.1} parent=0 // pred_check_branch
    %661 = sbr.rel (0) target = $region25
  $region24: #{double_conv.1} parent=0 // pred_region
    _
  $region25: #{double_conv.1} parent=0 // pred_fallthru
    _

</llo_original>
